<compile_context>
chip_gen: v5e
topology: v5e:2x2
jax: 0.10.0
libtpu: 0.0.40
codegen_flags: <defaults>
</compile_context>

<pallas_src>
import functools

import jax
import jax.numpy as jnp
import numpy as np
from jax.experimental import pallas as pl
from jax.experimental.pallas import tpu as pltpu

NEG_INF = -1e30          # finite "masked" score (avoids NaN from -inf - -inf)
LEAKY_SLOPE = 0.01       # F.leaky_relu default negative_slope


# ---------------------------------------------------------------------------
# Kernel 1: fused projection  h @ [W_cat | W_src | W_dst]
# ---------------------------------------------------------------------------
def _proj_kernel(h_ref, w_ref, z_ref, esrc_ref, edst_ref, *, hd_width,
                 num_heads, matmul_dtype):
    h_blk = h_ref[...]
    w_all = w_ref[...]
    if matmul_dtype != jnp.float32:
        h_blk = h_blk.astype(matmul_dtype)
        w_all = w_all.astype(matmul_dtype)
    zz = jnp.dot(h_blk, w_all, preferred_element_type=jnp.float32)
    z_ref[...] = zz[:, :hd_width].astype(z_ref.dtype)
    esrc_ref[...] = zz[:, hd_width:hd_width + num_heads].astype(esrc_ref.dtype)
    edst_ref[...] = zz[:, hd_width + num_heads:].astype(edst_ref.dtype)


# ---------------------------------------------------------------------------
# Kernel 2: adjacency-masked attention softmax + AV, flash-style over src tiles
# ---------------------------------------------------------------------------
def _attn_kernel(z_ref, esrc_ref, edst_ref, adj_ref, out_ref,
                 m_sc, l_sc, acc_sc, *, num_heads, out_dim, matmul_dtype):
    j = pl.program_id(1)

    @pl.when(j == 0)
    def _init():
        m_sc[...] = jnp.full(m_sc.shape, NEG_INF, dtype=m_sc.dtype)
        l_sc[...] = jnp.zeros(l_sc.shape, dtype=l_sc.dtype)
        acc_sc[...] = jnp.zeros(acc_sc.shape, dtype=acc_sc.dtype)

    mask = adj_ref[...] != 0                       # (TR, TS) bool
    e_src_all = esrc_ref[...]                      # (H, TS)  pre-transposed
    e_dst_all = edst_ref[...]                      # (TR, H)
    z_blk = z_ref[...]                             # (TS, H*D)
    z_mm = z_blk if z_blk.dtype == matmul_dtype else z_blk.astype(matmul_dtype)

    # TODO(synk): for real sizes pack H*out_dim to a multiple of 128 and use a
    # single batched dot_general over heads so the AV matmul fills the MXU.
    for hd in range(num_heads):
        cols = slice(hd * out_dim, (hd + 1) * out_dim)
        src_row = e_src_all[hd:hd + 1, :]          # (1, TS)  free sublane slice
        dst_col = e_dst_all[:, hd:hd + 1]          # (TR, 1)
        e = src_row + dst_col                      # e[v,u] = a_s.z_u + a_d.z_v
        e = jnp.maximum(e, LEAKY_SLOPE * e)        # leaky ReLU
        e = jnp.where(mask, e, NEG_INF)

        # online-softmax update for this head (exact when n_src == 1)
        m_old = m_sc[:, hd:hd + 1]                 # (TR, 1)
        m_new = jnp.maximum(m_old, jnp.max(e, axis=1, keepdims=True))
        corr = jnp.exp(m_old - m_new)              # rescale old partials
        p = jnp.exp(e - m_new)                     # masked entries underflow to 0
        l_sc[:, hd:hd + 1] = corr * l_sc[:, hd:hd + 1] + jnp.sum(
            p, axis=1, keepdims=True)
        pv = jnp.dot(p.astype(matmul_dtype), z_mm[:, cols],
                     preferred_element_type=jnp.float32)
        acc_sc[:, cols] = corr * acc_sc[:, cols] + pv
        m_sc[:, hd:hd + 1] = m_new

    @pl.when(j == pl.num_programs(1) - 1)
    def _finalize():
        # NOTE: rows with zero unmasked entries yield uniform attention over
        # all nodes (the dense reference would divide by ~0); callers must
        # guarantee >=1 incoming edge (e.g. self-loops), as DGL requires.
        for hd in range(num_heads):
            cols = slice(hd * out_dim, (hd + 1) * out_dim)
            inv = pl.reciprocal(l_sc[:, hd:hd + 1], approx=False)
            out_ref[:, cols] = (acc_sc[:, cols] * inv).astype(out_ref.dtype)


# ---------------------------------------------------------------------------
# Generation-aware VMEM / tiling heuristics
# ---------------------------------------------------------------------------
def _vmem_capacity_bytes():
    try:
        return int(pltpu.get_tpu_info().vmem_capacity_bytes)
    except Exception:
        pass
    try:
        if "v7" in jax.devices()[0].device_kind.lower():
            return 64 * 1024 * 1024            # v7x: 64 MiB per TensorCore
    except Exception:
        pass
    return 128 * 1024 * 1024                   # v5e / v6e


def _choose_tiles(n, num_heads, hd_width, vmem_budget):
    """Pick (row_tile, src_tile); budget already has ~25% headroom removed."""
    # Source (reduction) axis: whole N when small, else 128-lane multiples so
    # the int8 adjacency block stays layout-native.
    if n <= 1024 or n % 128 != 0:
        src_tile = n
    else:
        src_tile = 512 if n % 512 == 0 else 128

    # Destination-row axis: multiples of 32 (int8 sublane tile) dividing N;
    # prefer >=2 tiles so v7x's two TensorCores both get work on the
    # "parallel" axis, and pick the largest tile that fits the VMEM budget.
    if n <= 32 or n % 32 != 0:
        return n, src_tile
    cands = [c for c in (512, 256, 128, 96, 64, 32) if c <= n // 2 and n % c == 0]
    if not cands:
        return n, src_tile
    row_tile = cands[-1]
    for c in cands:
        est = (2 * c * src_tile                       # adj int8, double-buffered
               + 2 * src_tile * hd_width * 4          # z source block
               + 2 * num_heads * src_tile * 4         # e_src^T block
               + 2 * c * (num_heads + hd_width) * 4   # e_dst + out blocks
               + c * (2 * num_heads + hd_width) * 4   # m/l/acc scratch
               + 8 * c * src_tile * 4)                # e/p f32 temporaries
        if est <= vmem_budget:
            row_tile = c
            break
    return row_tile, src_tile


# ---------------------------------------------------------------------------
# Wrapper
# ---------------------------------------------------------------------------
def multi_head_gat(h, W_t, A, adj, merge="cat", use_bf16_matmul=False):
    """h: (N, in_dim); W_t: (H, in_dim, out_dim) pre-transposed fc weights;
    A: (H, 2, out_dim) with A[h,0]=a_src, A[h,1]=a_dst; adj: (N, N) where
    adj[dst, src] != 0 means an edge src -> dst.

    merge='cat'  -> (N, H*out_dim)  == torch.cat(head_outs, dim=1)
    merge!='cat' -> scalar          == torch.mean(torch.stack(head_outs))
    """
    N, in_dim = h.shape
    num_heads, _, out_dim = W_t.shape
    hd_width = num_heads * out_dim
    mm_dtype = jnp.bfloat16 if use_bf16_matmul else jnp.float32

    # ---- fused weights (wrapper-side, tiny) --------------------------------
    # W_cat[:, h*D+d] = W_t[h, :, d]   (per-head fc, concatenated columns)
    W_cat = jnp.transpose(W_t, (1, 0, 2)).reshape(in_dim, hd_width)
    # Score weights folded algebraically into the projection:
    #   e_src = (h @ W_h) @ a_src_h = h @ (W_h @ a_src_h)
    W_src = jnp.einsum("hid,hd->ih", W_t, A[:, 0, :])        # (in_dim, H)
    W_dst = jnp.einsum("hid,hd->ih", W_t, A[:, 1, :])        # (in_dim, H)
    W_all = jnp.concatenate([W_cat, W_src, W_dst], axis=1).astype(jnp.float32)

    vmem_limit = (_vmem_capacity_bytes() * 3) // 4   # ~75% of physical VMEM

    # ---- kernel 1: projection (hoisted out of the row-tile grid) -----------
    proj_tile = N if (N <= 512 or N % 256 != 0) else 256
    proj_kernel = functools.partial(
        _proj_kernel, hd_width=hd_width, num_heads=num_heads,
        matmul_dtype=mm_dtype)
    z, e_src, e_dst = pl.pallas_call(
        proj_kernel,
        out_shape=(
            jax.ShapeDtypeStruct((N, hd_width), jnp.float32),
            jax.ShapeDtypeStruct((N, num_heads), jnp.float32),
            jax.ShapeDtypeStruct((N, num_heads), jnp.float32),
        ),
        grid=(N // proj_tile,),
        in_specs=[
            pl.BlockSpec((proj_tile, in_dim), lambda i: (i, 0)),
            pl.BlockSpec((in_dim, hd_width + 2 * num_heads), lambda i: (0, 0)),
        ],
        out_specs=(
            pl.BlockSpec((proj_tile, hd_width), lambda i: (i, 0)),
            pl.BlockSpec((proj_tile, num_heads), lambda i: (i, 0)),
            pl.BlockSpec((proj_tile, num_heads), lambda i: (i, 0)),
        ),
        compiler_params=pltpu.CompilerParams(
            dimension_semantics=("parallel",),
            vmem_limit_bytes=vmem_limit,
        ),
    )(h.astype(jnp.float32), W_all)

    # (H, N) layout so each head's source row is a free sublane slice.
    e_src_T = e_src.T
    adj_i8 = (adj != 0).astype(jnp.int8)        # 4x less DMA/VMEM than f32 adj

    # ---- kernel 2: masked softmax + AV, flash-style over source tiles ------
    row_tile, src_tile = _choose_tiles(N, num_heads, hd_width, vmem_limit)
    n_row, n_src = N // row_tile, N // src_tile
    attn_kernel = functools.partial(
        _attn_kernel, num_heads=num_heads, out_dim=out_dim,
        matmul_dtype=mm_dtype)
    out = pl.pallas_call(
        attn_kernel,
        out_shape=jax.ShapeDtypeStruct((N, hd_width), jnp.float32),
        grid=(n_row, n_src),
        in_specs=[
            pl.BlockSpec((src_tile, hd_width), lambda i, j: (j, 0)),    # z
            pl.BlockSpec((num_heads, src_tile), lambda i, j: (0, j)),   # e_src^T
            pl.BlockSpec((row_tile, num_heads), lambda i, j: (i, 0)),   # e_dst
            pl.BlockSpec((row_tile, src_tile), lambda i, j: (i, j)),    # adj i8
        ],
        out_specs=pl.BlockSpec((row_tile, hd_width), lambda i, j: (i, 0)),
        scratch_shapes=[
            pltpu.VMEM((row_tile, num_heads), jnp.float32),   # running max  m
            pltpu.VMEM((row_tile, num_heads), jnp.float32),   # running sum  l
            pltpu.VMEM((row_tile, hd_width), jnp.float32),    # running AV acc
        ],
        compiler_params=pltpu.CompilerParams(
            dimension_semantics=("parallel", "arbitrary"),
            vmem_limit_bytes=vmem_limit,
        ),
    )(z, e_src_T, e_dst, adj_i8)

    if merge == "cat":
        return out                                # (N, H*out_dim)
    return jnp.mean(out)                          # scalar (layout-independent)


# ---------------------------------------------------------------------------
# Pure-JAX reference (same GAT semantics on a dense adjacency)
# ---------------------------------------------------------------------------
def _reference(h, W_t, A, adj):
    outs = []
    mask = adj != 0
    for hd in range(W_t.shape[0]):
        z = h @ W_t[hd]
        proj = z @ A[hd].T
        e = proj[:, 0:1].T + proj[:, 1:2]
        e = jnp.where(e > 0, e, LEAKY_SLOPE * e)
        e = jnp.where(mask, e, NEG_INF)
        m = jnp.max(e, axis=1, keepdims=True)
        p = jnp.where(mask, jnp.exp(e - m), 0.0)
        alpha = p / jnp.sum(p, axis=1, keepdims=True)
        outs.append(alpha @ z)
    return jnp.concatenate(outs, axis=1)


if __name__ == "__main__":
    # Small deterministic setup
    N, IN_DIM, OUT_DIM, HEADS = 32, 16, 8, 4
    key = jax.random.PRNGKey(0)
    k_h, k_w, k_a, k_adj = jax.random.split(key, 4)

    # Node features
    h = jax.random.normal(k_h, (N, IN_DIM), dtype=jnp.float32)

    # Xavier-normal-ish init with gain = calculate_gain('relu') = sqrt(2)
    gain = float(np.sqrt(2.0))
    std_fc = gain * np.sqrt(2.0 / (IN_DIM + OUT_DIM))
    std_attn = gain * np.sqrt(2.0 / (2 * OUT_DIM + 1))
    # fc weight: torch shape (out_dim, in_dim); stored pre-transposed (in_dim, out_dim)
    W_t = std_fc * jax.random.normal(k_w, (HEADS, IN_DIM, OUT_DIM), dtype=jnp.float32)
    # attn_fc weight: torch shape (1, 2*out_dim); stored as (2, out_dim) = [a_src, a_dst]
    A = std_attn * jax.random.normal(k_a, (HEADS, 2, OUT_DIM), dtype=jnp.float32)

    # Random directed graph with self-loops (every node has >=1 incoming edge,
    # matching DGL's requirement that the reduce is well-defined).
    adj = jax.random.bernoulli(k_adj, p=0.3, shape=(N, N)).astype(jnp.float32)
    adj = jnp.maximum(adj, jnp.eye(N, dtype=jnp.float32))

    out = multi_head_gat(h, W_t, A, adj, merge="cat")
    out = jax.block_until_ready(out)

    assert out.shape == (N, HEADS * OUT_DIM)
    ref = _reference(h, W_t, A, adj)
    np.testing.assert_allclose(np.asarray(out), np.asarray(ref), rtol=1e-5, atol=1e-5)

    print("KERNEL_OK")
</pallas_src>

<mosaic_0001>
module attributes {stable_mosaic.version = 11 : i64} {
  func.func @_proj_kernel(%arg0: i32, %arg1: memref<32x16xf32, #tpu.memory_space<vmem>>, %arg2: memref<16x40xf32, #tpu.memory_space<vmem>>, %arg3: memref<32x32xf32, #tpu.memory_space<vmem>>, %arg4: memref<32x4xf32, #tpu.memory_space<vmem>>, %arg5: memref<32x4xf32, #tpu.memory_space<vmem>>) attributes {dimension_semantics = [#tpu.dimension_semantics<parallel>], iteration_bounds = array<i64: 1>, scalar_prefetch = 0 : i64, scratch_operands = 0 : i64, tpu.core_type = #tpu.core_type<tc>, window_params = [{transform_indices = @transform_0, window_bounds = array<i64: 32, 16>}, {pipeline_mode = #tpu.pipeline_mode<synchronous>, transform_indices = @transform_1, window_bounds = array<i64: 16, 40>}, {transform_indices = @transform_2, window_bounds = array<i64: 32, 32>}, {transform_indices = @transform_3, window_bounds = array<i64: 32, 4>}, {transform_indices = @transform_4, window_bounds = array<i64: 32, 4>}]} {
    %c0 = arith.constant 0 : index
    %c0_0 = arith.constant 0 : index
    %0 = vector.load %arg1[%c0, %c0_0] : memref<32x16xf32, #tpu.memory_space<vmem>>, vector<32x16xf32>
    %c0_1 = arith.constant 0 : index
    %c0_2 = arith.constant 0 : index
    %1 = vector.load %arg2[%c0_1, %c0_2] : memref<16x40xf32, #tpu.memory_space<vmem>>, vector<16x40xf32>
    %cst = arith.constant dense<0.000000e+00> : vector<32x40xf32>
    %2 = tpu.matmul %0, %1, %cst {dimension_numbers = #tpu.dot_dimension_numbers<[1], [0], [0], [1], [0, 0, 1, 1], [], []>} : vector<32x16xf32>, vector<16x40xf32>, vector<32x40xf32> -> vector<32x40xf32>
    %3 = vector.extract_strided_slice %2 {offsets = [0, 0], sizes = [32, 32], strides = [1, 1]} : vector<32x40xf32> to vector<32x32xf32>
    %c0_3 = arith.constant 0 : index
    %c0_4 = arith.constant 0 : index
    %4 = vector.load %arg3[%c0_3, %c0_4] : memref<32x32xf32, #tpu.memory_space<vmem>>, vector<32x32xf32>
    tpu.vector_store %arg3[%c0_3, %c0_4], %3 {strides = array<i32>} : memref<32x32xf32, #tpu.memory_space<vmem>>, vector<32x32xf32>,
    %5 = vector.extract_strided_slice %2 {offsets = [0, 32], sizes = [32, 4], strides = [1, 1]} : vector<32x40xf32> to vector<32x4xf32>
    %c0_5 = arith.constant 0 : index
    %c0_6 = arith.constant 0 : index
    %6 = vector.load %arg4[%c0_5, %c0_6] : memref<32x4xf32, #tpu.memory_space<vmem>>, vector<32x4xf32>
    tpu.vector_store %arg4[%c0_5, %c0_6], %5 {strides = array<i32>} : memref<32x4xf32, #tpu.memory_space<vmem>>, vector<32x4xf32>,
    %7 = vector.extract_strided_slice %2 {offsets = [0, 36], sizes = [32, 4], strides = [1, 1]} : vector<32x40xf32> to vector<32x4xf32>
    %c0_7 = arith.constant 0 : index
    %c0_8 = arith.constant 0 : index
    %8 = vector.load %arg5[%c0_7, %c0_8] : memref<32x4xf32, #tpu.memory_space<vmem>>, vector<32x4xf32>
    tpu.vector_store %arg5[%c0_7, %c0_8], %7 {strides = array<i32>} : memref<32x4xf32, #tpu.memory_space<vmem>>, vector<32x4xf32>,
    return
  }
  func.func @transform_0(%arg0: i32) -> (i32, i32) {
    %c0_i32 = arith.constant 0 : i32
    %c0_i32_0 = arith.constant 0 : i32
    return %arg0, %c0_i32 : i32, i32
  }
  func.func @transform_1(%arg0: i32) -> (i32, i32) {
    %c0_i32 = arith.constant 0 : i32
    %c0_i32_0 = arith.constant 0 : i32
    %c0_i32_1 = arith.constant 0 : i32
    return %c0_i32, %c0_i32_0 : i32, i32
  }
  func.func @transform_2(%arg0: i32) -> (i32, i32) {
    %c0_i32 = arith.constant 0 : i32
    %c0_i32_0 = arith.constant 0 : i32
    return %arg0, %c0_i32 : i32, i32
  }
  func.func @transform_3(%arg0: i32) -> (i32, i32) {
    %c0_i32 = arith.constant 0 : i32
    %c0_i32_0 = arith.constant 0 : i32
    return %arg0, %c0_i32 : i32, i32
  }
  func.func @transform_4(%arg0: i32) -> (i32, i32) {
    %c0_i32 = arith.constant 0 : i32
    %c0_i32_0 = arith.constant 0 : i32
    return %arg0, %c0_i32 : i32, i32
  }
}

</mosaic_0001>

<llo_original>
// kernel: tpu_custom_call.1
$region0: #{tpu_custom_call.1}
  #allocation0 [shape = 'u32[]', space=smem, size = 0x4, offset = 0x4, fixed_abs, tag = 'smem constant byte address 0x4 - core index']
  #allocation1 [shape = 'u32[72,128]{1,0:T(1,128)}', space=vmem, size = 0x9000, scoped, tag = 'internal scratch']
  %s0 = inlined_call_operand.vmem [shape: f32[32,16], index: 0, kind: input, shape index: {}]
  %s1 = inlined_call_operand.vmem [shape: f32[16,40], index: 1, kind: input, shape index: {}]
  %s2 = inlined_call_operand.hbm [shape: f32[32,32], index: 2, kind: output, shape index: {0}]
  %s3 = inlined_call_operand.vmem [shape: f32[32,4], index: 3, kind: output, shape index: {1}]
  %s4 = inlined_call_operand.vmem [shape: f32[32,4], index: 4, kind: output, shape index: {2}]
  %5 = xla_tuple %s2, %s3, %s4
  %s6 = sld [smem:[#allocation0]]
  $region34: #{tpu_custom_call.1} parent=0
    _
  %s8 = ssub.s32 1, %s6
  %s9 = scalar_select 0, %s8, %s6
  $region1: #{tpu_custom_call.1} parent=0
    #allocation2 [shape = 'u8[16384]{0}', space=vmem, size = 0x4000, scoped, tag = 'output window, operand 0, single buffered']
    #allocation3 [shape = 's32[1]{0}', space=sflag, size = 0x4, scoped, tag = 'scoped memory for tpu_custom_call.1']
    %10 = vsyncpa [#allocation3], 0
    // Predicated region
    $region2: #{tpu_custom_call.1} parent=1 // pred_check
      _
    $region3: #{tpu_custom_call.1} parent=1 // pred_check_branch
      %12 = sbr.rel (0) target = $region5
    $region4: #{tpu_custom_call.1} parent=1 // pred_region
      _
    $region5: #{tpu_custom_call.1} parent=1 // pred_fallthru
      _
    // Predicated region
    $region6: #{tpu_custom_call.1} parent=1 // pred_check
      _
    $region7: #{tpu_custom_call.1} parent=1 // pred_check_branch
      %14 = sbr.rel (0) target = $region9
    $region8: #{tpu_custom_call.1} parent=1 // pred_region
      _
    $region9: #{tpu_custom_call.1} parent=1 // pred_fallthru
      _
    %v15 = vld [vmem:[%s0] sm:$0xff]
    %v16 = vld [vmem:[%s0 + $0x8] sm:$0xff]
    %v17 = vld [vmem:[%s0 + $0x10] sm:$0xff]
    %v18 = vld [vmem:[%s0 + $0x18] sm:$0xff]
    %v19 = vld [vmem:[%s1] sm:$0xff]
    %v20 = vld [vmem:[%s1 + $0x8] sm:$0xff]
    %vm21 = vcmask 130048
    %v23 = vsel %vm21, %v15, 0
    %v26 = vsel %vm21, %v16, 0
    %v29 = vsel %vm21, %v17, 0
    %v32 = vsel %vm21, %v18, 0
    %34 = vmatpush.msra.mxu0 0.0
    %35 = vmatpush.msra.mxu0 0.0
    %36 = vmatpush.msra.mxu0 0.0
    %37 = vmatpush.msra.mxu0 0.0
    %38 = vmatpush.msra.mxu0 0.0
    %39 = vmatpush.msra.mxu0 0.0
    %40 = vmatpush.msra.mxu0 0.0
    %41 = vmatpush.msra.mxu0 0.0
    %42 = vmatpush.msra.mxu0 0.0
    %43 = vmatpush.msra.mxu0 0.0
    %44 = vmatpush.msra.mxu0 0.0
    %45 = vmatpush.msra.mxu0 0.0
    %46 = vmatpush.msra.mxu0 0.0
    %47 = vmatpush.msra.mxu0 0.0
    %48 = vmatpush.msra.mxu0 %v20
    %49 = vmatpush.msra.mxu0 %v19
    %50 = vmatmul.f32.gmra.mxu0 %v23
    %v51 = vpop.f32.mrf.mxu0
    %v52 = vadd.f32 0.0, %v51
    %53 = vmatmul.f32.gmra.mxu0 %v26
    %v54 = vpop.f32.mrf.mxu0
    %v55 = vadd.f32 0.0, %v54
    %56 = vmatmul.f32.gmra.mxu0 %v29
    %v57 = vpop.f32.mrf.mxu0
    %v58 = vadd.f32 0.0, %v57
    %59 = vmatmul.f32.gmra.mxu0 %v32
    %v60 = vpop.f32.mrf.mxu0
    %v61 = vadd.f32 0.0, %v60
    %62 = vdwg.mxu0
    %vm63 = vcmask 261120
    %64 = vst.msk [vmem:[#allocation2] sm:$0xff] %vm63, %v52
    %65 = vst.msk [vmem:[#allocation2 + $0x8] sm:$0xff] %vm63, %v55
    %66 = vst.msk [vmem:[#allocation2 + $0x10] sm:$0xff] %vm63, %v58
    %67 = vst.msk [vmem:[#allocation2 + $0x18] sm:$0xff] %vm63, %v61
    %72 = vrot.lane.b32.xlu0 %v52, 96
    %v73 = vpop.permute.xlu0 %72
    %74 = vrot.lane.b32.xlu0 %v55, 96
    %v75 = vpop.permute.xlu0 %74
    %76 = vrot.lane.b32.xlu0 %v58, 96
    %v77 = vpop.permute.xlu0 %76
    %78 = vrot.lane.b32.xlu0 %v61, 96
    %v79 = vpop.permute.xlu0 %78
    %vm84 = vcmask 31744
    %85 = vst.msk [vmem:[%s3] sm:$0xff] %vm84, %v73
    %86 = vst.msk [vmem:[%s3 + $0x8] sm:$0xff] %vm84, %v75
    %87 = vst.msk [vmem:[%s3 + $0x10] sm:$0xff] %vm84, %v77
    %88 = vst.msk [vmem:[%s3 + $0x18] sm:$0xff] %vm84, %v79
    %89 = vrot.lane.b32.xlu0 %v52, 92
    %v90 = vpop.permute.xlu0 %89
    %91 = vrot.lane.b32.xlu0 %v55, 92
    %v92 = vpop.permute.xlu0 %91
    %93 = vrot.lane.b32.xlu0 %v58, 92
    %v94 = vpop.permute.xlu0 %93
    %95 = vrot.lane.b32.xlu0 %v61, 92
    %v96 = vpop.permute.xlu0 %95
    %101 = vst.msk [vmem:[%s4] sm:$0xff] %vm84, %v90
    %102 = vst.msk [vmem:[%s4 + $0x8] sm:$0xff] %vm84, %v92
    %103 = vst.msk [vmem:[%s4 + $0x10] sm:$0xff] %vm84, %v94
    %104 = vst.msk [vmem:[%s4 + $0x18] sm:$0xff] %vm84, %v96
    // Predicated region
    $region10: #{tpu_custom_call.1} parent=1 // pred_check
      _
    $region11: #{tpu_custom_call.1} parent=1 // pred_check_branch
      %106 = sbr.rel (0) target = $region13
    $region12: #{tpu_custom_call.1} parent=1 // pred_region
      %108 = vsyncadd [#allocation3], 0
      %s109 = sshll.u32 [#allocation2], 4
      %s110 = int_to_ptr.vmem [resolvable:$true] %s109
      %s111 = sshll.u32 %s2, 4
      %s112 = int_to_ptr.hbm [resolvable:$true] %s111
      %117 = dma.vmem_to_hbm [thread:$0]  %s110, 512, %s112, [#allocation3], 128, 128, 8
    $region13: #{tpu_custom_call.1} parent=1 // pred_fallthru
      _
    // Predicated region
    $region14: #{tpu_custom_call.1} parent=1 // pred_check
      _
    $region15: #{tpu_custom_call.1} parent=1 // pred_check_branch
      %119 = sbr.rel (0) target = $region17
    $region16: #{tpu_custom_call.1} parent=1 // pred_region
      _
    $region17: #{tpu_custom_call.1} parent=1 // pred_fallthru
      _
    // Predicated region
    $region18: #{tpu_custom_call.1} parent=1 // pred_check
      _
    $region19: #{tpu_custom_call.1} parent=1 // pred_check_branch
      %121 = sbr.rel (0) target = $region21
    $region20: #{tpu_custom_call.1} parent=1 // pred_region
      _
    $region21: #{tpu_custom_call.1} parent=1 // pred_fallthru
      _
    // Predicated region
    $region22: #{tpu_custom_call.1} parent=1 // pred_check
      _
    $region23: #{tpu_custom_call.1} parent=1 // pred_check_branch
      %123 = sbr.rel (0) target = $region25
    $region24: #{tpu_custom_call.1} parent=1 // pred_region
      %125 = dma.done [#allocation3], 512
    $region25: #{tpu_custom_call.1} parent=1 // pred_fallthru
      _
    // Predicated region
    $region26: #{tpu_custom_call.1} parent=1 // pred_check
      _
    $region27: #{tpu_custom_call.1} parent=1 // pred_check_branch
      %127 = sbr.rel (0) target = $region29
    $region28: #{tpu_custom_call.1} parent=1 // pred_region
      _
    $region29: #{tpu_custom_call.1} parent=1 // pred_fallthru
      _
    // Predicated region
    $region30: #{tpu_custom_call.1} parent=1 // pred_check
      _
    $region31: #{tpu_custom_call.1} parent=1 // pred_check_branch
      %129 = sbr.rel (0) target = $region33
    $region32: #{tpu_custom_call.1} parent=1 // pred_region
      _
    $region33: #{tpu_custom_call.1} parent=1 // pred_fallthru
      _
    %130 = vsyncpa [#allocation3], 1

</llo_original>
